<compile_context>
chip_gen: v7x
topology: tpu7x:2x2x1
jax: 0.10.0
libtpu: 0.0.40
codegen_flags: <defaults>
</compile_context>

<pallas_src>
import functools

import jax
import jax.numpy as jnp
from jax.experimental import pallas as pl
from jax.experimental.pallas import tpu as pltpu

# --------------------------- module hyper-params (toy) -------------------------
B = 2
T = 16
D_MODEL = 32
KSIZE = 3                     # odd -> 'same' padding
FF_EXP = 4
HIDDEN = D_MODEL * FF_EXP     # 128 (lane-dense hidden width)
LRELU_SLOPE = 0.3
EPS = 1e-5                    # nn.LayerNorm default eps


# ----------------------------------- kernel ------------------------------------
def ff_kernel(x_ref, lnw_ref, lnb_ref, w1_ref, b1_ref, w2_ref, b2_ref, o_ref,
              *, seq_len, ksize):
    """LN -> Conv1d(k,'same') -> LeakyReLU -> Conv1d(1) -> *0.5 on a (rows, D) slab.

    The row block contains whole sequences only, so the roll+mask conv never
    needs halo rows across block boundaries.
    """
    rows, d = x_ref.shape
    pad = ksize // 2

    x = x_ref[...]                                           # (rows, D) f32

    # LayerNorm over channels — f32 statistics, rsqrt on the EUP slot.
    mu = jnp.mean(x, axis=-1, keepdims=True)
    var = jnp.mean((x - mu) ** 2, axis=-1, keepdims=True)
    xn = (x - mu) * jax.lax.rsqrt(var + EPS) * lnw_ref[...] + lnb_ref[...]

    # Per-row time index within its sequence (block rows are whole sequences).
    row = jax.lax.broadcasted_iota(jnp.int32, (rows, 1), 0)
    tpos = row % seq_len                                     # (rows, 1)

    # K shifted copies of xn via XLU rolls + per-row boundary masks.
    # Rows whose shifted source lies outside [0, seq_len) — including every row
    # that would read across a batch/sequence seam — are zeroed, which matches
    # Conv1d zero 'same' padding exactly.
    slabs = []
    for j in range(ksize):
        off = j - pad                    # tap j reads xn[:, t + off, :]
        if off == 0:
            slabs.append(xn)
            continue
        rolled = pltpu.roll(xn, shift=(-off) % rows, axis=0)
        valid = (tpos + off >= 0) & (tpos + off < seq_len)   # (rows, 1) row mask
        slabs.append(jnp.where(valid, rolled, 0.0))
    xcat = jnp.concatenate(slabs, axis=-1)                   # (rows, K*D)

    # conv_1: the k-tap conv as one MXU push (K = k*D) — bf16 operands, f32 acc.
    h = jnp.dot(xcat.astype(jnp.bfloat16), w1_ref[...],
                preferred_element_type=jnp.float32) + b1_ref[...]
    h = jnp.maximum(h, LRELU_SLOPE * h)                      # LeakyReLU (slope < 1)

    # conv_2 (pointwise) — bf16 operands, f32 acc — then the 0.5 scale.
    y = jnp.dot(h.astype(jnp.bfloat16), w2_ref[...],
                preferred_element_type=jnp.float32) + b2_ref[...]
    o_ref[...] = (0.5 * y).astype(o_ref.dtype)


# ----------------------------------- wrapper -----------------------------------
def feed_forward(x, p, *, rows_per_block=None):
    B_, T_, D_ = x.shape
    k, _, hid = p['w1_taps'].shape
    BT = B_ * T_

    # Row block = whole sequences (correctness of the seam-masked roll) and a
    # multiple of 8 (sublane tile).  At the toy shape: one resident block.
    if rows_per_block is None:
        rows_per_block = BT
    assert rows_per_block % T_ == 0 and BT % rows_per_block == 0
    assert rows_per_block % 8 == 0

    # Free metadata reshape on the HBM array (hoisted out of the kernel).
    x2 = x.reshape(BT, D_)

    # PyTorch conv weight (Cout, Cin, k) is kept as per-tap transposed taps
    # (k, Cin, Cout); flatten to (k*Cin, Cout) and cast MXU operands to bf16.
    w1 = p['w1_taps'].reshape(k * D_, hid).astype(jnp.bfloat16)
    w2 = p['w2'].astype(jnp.bfloat16)

    grid = (BT // rows_per_block,)
    kern = functools.partial(ff_kernel, seq_len=T_, ksize=k)

    out2 = pl.pallas_call(
        kern,
        out_shape=jax.ShapeDtypeStruct((BT, D_), jnp.float32),
        grid_spec=pltpu.PrefetchScalarGridSpec(
            num_scalar_prefetch=0,
            grid=grid,
            in_specs=[
                pl.BlockSpec((rows_per_block, D_), lambda i: (i, 0)),   # x rows
                pl.BlockSpec((1, D_), lambda i: (0, 0)),                # ln_w (resident)
                pl.BlockSpec((1, D_), lambda i: (0, 0)),                # ln_b
                pl.BlockSpec((k * D_, hid), lambda i: (0, 0)),          # w1
                pl.BlockSpec((1, hid), lambda i: (0, 0)),               # b1
                pl.BlockSpec((hid, D_), lambda i: (0, 0)),              # w2
                pl.BlockSpec((1, D_), lambda i: (0, 0)),                # b2
            ],
            out_specs=pl.BlockSpec((rows_per_block, D_), lambda i: (i, 0)),
        ),
        compiler_params=pltpu.CompilerParams(
            dimension_semantics=("parallel",),
        ),
    )(x2, p['ln_w'], p['ln_b'], w1, p['b1'], w2, p['b2'])

    return out2.reshape(B_, T_, D_)


# ------------------------------ pure-JAX reference ------------------------------
def feed_forward_ref(x, p):
    B_, T_, D_ = x.shape
    k = p['w1_taps'].shape[0]
    pad = k // 2
    mu = jnp.mean(x, axis=-1, keepdims=True)
    var = jnp.mean((x - mu) ** 2, axis=-1, keepdims=True)
    xn = (x - mu) / jnp.sqrt(var + EPS) * p['ln_w'][0] + p['ln_b'][0]
    xp = jnp.pad(xn, ((0, 0), (pad, pad), (0, 0)))
    taps = [jnp.einsum('btd,dh->bth', xp[:, j:j + T_, :], p['w1_taps'][j],
                       precision=jax.lax.Precision.HIGHEST) for j in range(k)]
    h = sum(taps) + p['b1'][0]
    h = jnp.where(h > 0, h, LRELU_SLOPE * h)
    y = jnp.einsum('bth,hd->btd', h, p['w2'],
                   precision=jax.lax.Precision.HIGHEST) + p['b2'][0]
    return 0.5 * y


# -------------------------------- parameter init --------------------------------
def make_params(key):
    k1, k2, k3, k4, k5, k6 = jax.random.split(key, 6)
    s = 0.05
    return {
        'ln_w': 1.0 + 0.1 * jax.random.normal(k5, (1, D_MODEL), jnp.float32),
        'ln_b': 0.1 * jax.random.normal(k6, (1, D_MODEL), jnp.float32),
        'w1_taps': s * jax.random.normal(k1, (KSIZE, D_MODEL, HIDDEN), jnp.float32),
        'b1': s * jax.random.normal(k2, (1, HIDDEN), jnp.float32),
        'w2': s * jax.random.normal(k3, (HIDDEN, D_MODEL), jnp.float32),
        'b2': s * jax.random.normal(k4, (1, D_MODEL), jnp.float32),
    }


# ------------------------------------- main --------------------------------------
if __name__ == "__main__":
    key = jax.random.PRNGKey(0)
    kp, kx = jax.random.split(key)
    params = make_params(kp)
    x = jax.random.normal(kx, (B, T, D_MODEL), jnp.float32)

    out = jax.block_until_ready(feed_forward(x, params))
    assert out.shape == (B, T, D_MODEL)
    assert bool(jnp.all(jnp.isfinite(out)))

    ref = feed_forward_ref(x, params)
    err = float(jnp.max(jnp.abs(out - ref)))
    assert err < 2e-2, f"mismatch vs pure-JAX reference: max abs err {err}"
    print("KERNEL_OK")
</pallas_src>

<mosaic_0001>
module attributes {stable_mosaic.version = 11 : i64} {
  func.func @ff_kernel(%arg0: i32, %arg1: memref<32x32xf32, #tpu.memory_space<vmem>>, %arg2: memref<1x32xf32, #tpu.memory_space<vmem>>, %arg3: memref<1x32xf32, #tpu.memory_space<vmem>>, %arg4: memref<96x128xbf16, #tpu.memory_space<vmem>>, %arg5: memref<1x128xf32, #tpu.memory_space<vmem>>, %arg6: memref<128x32xbf16, #tpu.memory_space<vmem>>, %arg7: memref<1x32xf32, #tpu.memory_space<vmem>>, %arg8: memref<32x32xf32, #tpu.memory_space<vmem>>) attributes {dimension_semantics = [#tpu.dimension_semantics<parallel>], iteration_bounds = array<i64: 1>, scalar_prefetch = 0 : i64, scratch_operands = 0 : i64, tpu.core_type = #tpu.core_type<tc>, window_params = [{transform_indices = @transform_0, window_bounds = array<i64: 32, 32>}, {pipeline_mode = #tpu.pipeline_mode<synchronous>, transform_indices = @transform_1, window_bounds = array<i64: 1, 32>}, {pipeline_mode = #tpu.pipeline_mode<synchronous>, transform_indices = @transform_2, window_bounds = array<i64: 1, 32>}, {pipeline_mode = #tpu.pipeline_mode<synchronous>, transform_indices = @transform_3, window_bounds = array<i64: 96, 128>}, {pipeline_mode = #tpu.pipeline_mode<synchronous>, transform_indices = @transform_4, window_bounds = array<i64: 1, 128>}, {pipeline_mode = #tpu.pipeline_mode<synchronous>, transform_indices = @transform_5, window_bounds = array<i64: 128, 32>}, {pipeline_mode = #tpu.pipeline_mode<synchronous>, transform_indices = @transform_6, window_bounds = array<i64: 1, 32>}, {transform_indices = @transform_7, window_bounds = array<i64: 32, 32>}]} {
    %c0 = arith.constant 0 : index
    %c0_0 = arith.constant 0 : index
    %0 = vector.load %arg1[%c0, %c0_0] : memref<32x32xf32, #tpu.memory_space<vmem>>, vector<32x32xf32>
    %cst = arith.constant dense<0.000000e+00> : vector<32xf32>
    %1 = vector.multi_reduction <add>, %0, %cst [1] : vector<32x32xf32> to vector<32xf32>
    %2 = vector.shape_cast %1 : vector<32xf32> to vector<32x1xf32>
    %cst_1 = arith.constant 3.200000e+01 : f32
    %3 = vector.broadcast %cst_1 : f32 to vector<32x1xf32>
    %4 = arith.divf %2, %3 : vector<32x1xf32>
    %5 = vector.broadcast %4 : vector<32x1xf32> to vector<32x32xf32>
    %6 = arith.subf %0, %5 : vector<32x32xf32>
    %7 = arith.mulf %6, %6 : vector<32x32xf32>
    %cst_2 = arith.constant dense<0.000000e+00> : vector<32xf32>
    %8 = vector.multi_reduction <add>, %7, %cst_2 [1] : vector<32x32xf32> to vector<32xf32>
    %9 = vector.shape_cast %8 : vector<32xf32> to vector<32x1xf32>
    %cst_3 = arith.constant 3.200000e+01 : f32
    %10 = vector.broadcast %cst_3 : f32 to vector<32x1xf32>
    %11 = arith.divf %9, %10 : vector<32x1xf32>
    %12 = vector.broadcast %4 : vector<32x1xf32> to vector<32x32xf32>
    %13 = arith.subf %0, %12 : vector<32x32xf32>
    %cst_4 = arith.constant 9.99999974E-6 : f32
    %14 = vector.broadcast %cst_4 : f32 to vector<32x1xf32>
    %15 = arith.addf %11, %14 : vector<32x1xf32>
    %16 = math.rsqrt %15 : vector<32x1xf32>
    %17 = vector.broadcast %16 : vector<32x1xf32> to vector<32x32xf32>
    %18 = arith.mulf %13, %17 : vector<32x32xf32>
    %c0_5 = arith.constant 0 : index
    %c0_6 = arith.constant 0 : index
    %19 = vector.load %arg2[%c0_5, %c0_6] : memref<1x32xf32, #tpu.memory_space<vmem>>, vector<1x32xf32>
    %20 = vector.broadcast %19 : vector<1x32xf32> to vector<32x32xf32>
    %21 = arith.mulf %18, %20 : vector<32x32xf32>
    %c0_7 = arith.constant 0 : index
    %c0_8 = arith.constant 0 : index
    %22 = vector.load %arg3[%c0_7, %c0_8] : memref<1x32xf32, #tpu.memory_space<vmem>>, vector<1x32xf32>
    %23 = vector.broadcast %22 : vector<1x32xf32> to vector<32x32xf32>
    %24 = arith.addf %21, %23 : vector<32x32xf32>
    %25 = tpu.iota {dimensions = array<i32: 0>} : vector<32x1xi32>
    %c16_i32 = arith.constant 16 : i32
    %c0_i32 = arith.constant 0 : i32
    %26 = arith.cmpi eq, %c16_i32, %c0_i32 : i32
    %c1_i32 = arith.constant 1 : i32
    %27 = arith.select %26, %c1_i32, %c16_i32 : i32
    %28 = vector.broadcast %27 : i32 to vector<32x1xi32>
    %29 = arith.remsi %25, %28 : vector<32x1xi32>
    %c0_i32_9 = arith.constant 0 : i32
    %30 = vector.broadcast %c0_i32_9 : i32 to vector<32x1xi32>
    %31 = arith.cmpi ne, %29, %30 : vector<32x1xi32>
    %c0_i32_10 = arith.constant 0 : i32
    %32 = vector.broadcast %c0_i32_10 : i32 to vector<32x1xi32>
    %33 = arith.cmpi slt, %29, %32 : vector<32x1xi32>
    %c0_i32_11 = arith.constant 0 : i32
    %34 = arith.cmpi slt, %27, %c0_i32_11 : i32
    %35 = vector.broadcast %34 : i1 to vector<32x1xi1>
    %36 = vector.broadcast %35 : vector<32x1xi1> to vector<32x1xi1>
    %37 = arith.xori %33, %36 : vector<32x1xi1>
    %38 = arith.andi %37, %31 : vector<32x1xi1>
    %39 = vector.broadcast %27 : i32 to vector<32x1xi32>
    %40 = arith.addi %29, %39 : vector<32x1xi32>
    %41 = arith.select %38, %40, %29 : vector<32x1xi1>, vector<32x1xi32>
    %c1_i32_12 = arith.constant 1 : i32
    %42 = tpu.dynamic_rotate %24 by %c1_i32_12 dim 0 : vector<32x32xf32>, i32 -> vector<32x32xf32>
    %c-1_i32 = arith.constant -1 : i32
    %43 = vector.broadcast %c-1_i32 : i32 to vector<32x1xi32>
    %44 = arith.addi %41, %43 : vector<32x1xi32>
    %c0_i32_13 = arith.constant 0 : i32
    %45 = vector.broadcast %c0_i32_13 : i32 to vector<32x1xi32>
    %46 = arith.cmpi sge, %44, %45 : vector<32x1xi32>
    %c-1_i32_14 = arith.constant -1 : i32
    %47 = vector.broadcast %c-1_i32_14 : i32 to vector<32x1xi32>
    %48 = arith.addi %41, %47 : vector<32x1xi32>
    %c16_i32_15 = arith.constant 16 : i32
    %49 = vector.broadcast %c16_i32_15 : i32 to vector<32x1xi32>
    %50 = arith.cmpi slt, %48, %49 : vector<32x1xi32>
    %51 = arith.andi %46, %50 : vector<32x1xi1>
    %cst_16 = arith.constant 0.000000e+00 : f32
    %52 = vector.shape_cast %51 : vector<32x1xi1> to vector<32x1xi1>
    %53 = vector.broadcast %52 : vector<32x1xi1> to vector<32x32xi1>
    %54 = vector.broadcast %cst_16 : f32 to vector<32x32xf32>
    %55 = arith.select %53, %42, %54 : vector<32x32xi1>, vector<32x32xf32>
    %c31_i32 = arith.constant 31 : i32
    %56 = tpu.dynamic_rotate %24 by %c31_i32 dim 0 : vector<32x32xf32>, i32 -> vector<32x32xf32>
    %c1_i32_17 = arith.constant 1 : i32
    %57 = vector.broadcast %c1_i32_17 : i32 to vector<32x1xi32>
    %58 = arith.addi %41, %57 : vector<32x1xi32>
    %c0_i32_18 = arith.constant 0 : i32
    %59 = vector.broadcast %c0_i32_18 : i32 to vector<32x1xi32>
    %60 = arith.cmpi sge, %58, %59 : vector<32x1xi32>
    %c1_i32_19 = arith.constant 1 : i32
    %61 = vector.broadcast %c1_i32_19 : i32 to vector<32x1xi32>
    %62 = arith.addi %41, %61 : vector<32x1xi32>
    %c16_i32_20 = arith.constant 16 : i32
    %63 = vector.broadcast %c16_i32_20 : i32 to vector<32x1xi32>
    %64 = arith.cmpi slt, %62, %63 : vector<32x1xi32>
    %65 = arith.andi %60, %64 : vector<32x1xi1>
    %cst_21 = arith.constant 0.000000e+00 : f32
    %66 = vector.shape_cast %65 : vector<32x1xi1> to vector<32x1xi1>
    %67 = vector.broadcast %66 : vector<32x1xi1> to vector<32x32xi1>
    %68 = vector.broadcast %cst_21 : f32 to vector<32x32xf32>
    %69 = arith.select %67, %56, %68 : vector<32x32xi1>, vector<32x32xf32>
    %70 = tpu.concatenate %55, %24, %69 in 1 : vector<32x32xf32>, vector<32x32xf32>, vector<32x32xf32> -> vector<32x96xf32>
    %71 = arith.truncf %70 : vector<32x96xf32> to vector<32x96xbf16>
    %c0_22 = arith.constant 0 : index
    %c0_23 = arith.constant 0 : index
    %72 = vector.load %arg4[%c0_22, %c0_23] : memref<96x128xbf16, #tpu.memory_space<vmem>>, vector<96x128xbf16>
    %cst_24 = arith.constant dense<0.000000e+00> : vector<32x128xf32>
    %73 = tpu.matmul %71, %72, %cst_24 {dimension_numbers = #tpu.dot_dimension_numbers<[1], [0], [0], [1], [0, 0, 1, 1], [], []>} : vector<32x96xbf16>, vector<96x128xbf16>, vector<32x128xf32> -> vector<32x128xf32>
    %c0_25 = arith.constant 0 : index
    %c0_26 = arith.constant 0 : index
    %74 = vector.load %arg5[%c0_25, %c0_26] : memref<1x128xf32, #tpu.memory_space<vmem>>, vector<1x128xf32>
    %75 = vector.broadcast %74 : vector<1x128xf32> to vector<32x128xf32>
    %76 = arith.addf %73, %75 : vector<32x128xf32>
    %cst_27 = arith.constant 3.000000e-01 : f32
    %77 = vector.broadcast %cst_27 : f32 to vector<32x128xf32>
    %78 = arith.mulf %77, %76 : vector<32x128xf32>
    %79 = arith.maximumf %76, %78 : vector<32x128xf32>
    %80 = arith.truncf %79 : vector<32x128xf32> to vector<32x128xbf16>
    %c0_28 = arith.constant 0 : index
    %c0_29 = arith.constant 0 : index
    %81 = vector.load %arg6[%c0_28, %c0_29] : memref<128x32xbf16, #tpu.memory_space<vmem>>, vector<128x32xbf16>
    %cst_30 = arith.constant dense<0.000000e+00> : vector<32x32xf32>
    %82 = tpu.matmul %80, %81, %cst_30 {dimension_numbers = #tpu.dot_dimension_numbers<[1], [0], [0], [1], [0, 0, 1, 1], [], []>} : vector<32x128xbf16>, vector<128x32xbf16>, vector<32x32xf32> -> vector<32x32xf32>
    %c0_31 = arith.constant 0 : index
    %c0_32 = arith.constant 0 : index
    %83 = vector.load %arg7[%c0_31, %c0_32] : memref<1x32xf32, #tpu.memory_space<vmem>>, vector<1x32xf32>
    %84 = vector.broadcast %83 : vector<1x32xf32> to vector<32x32xf32>
    %85 = arith.addf %82, %84 : vector<32x32xf32>
    %cst_33 = arith.constant 5.000000e-01 : f32
    %86 = vector.broadcast %cst_33 : f32 to vector<32x32xf32>
    %87 = arith.mulf %86, %85 : vector<32x32xf32>
    %c0_34 = arith.constant 0 : index
    %c0_35 = arith.constant 0 : index
    %88 = vector.load %arg8[%c0_34, %c0_35] : memref<32x32xf32, #tpu.memory_space<vmem>>, vector<32x32xf32>
    tpu.vector_store %arg8[%c0_34, %c0_35], %87 {strides = array<i32>} : memref<32x32xf32, #tpu.memory_space<vmem>>, vector<32x32xf32>,
    return
  }
  func.func @transform_0(%arg0: i32) -> (i32, i32) {
    %c0_i32 = arith.constant 0 : i32
    %c0_i32_0 = arith.constant 0 : i32
    return %arg0, %c0_i32 : i32, i32
  }
  func.func @transform_1(%arg0: i32) -> (i32, i32) {
    %c0_i32 = arith.constant 0 : i32
    %c0_i32_0 = arith.constant 0 : i32
    %c0_i32_1 = arith.constant 0 : i32
    return %c0_i32, %c0_i32_0 : i32, i32
  }
  func.func @transform_2(%arg0: i32) -> (i32, i32) {
    %c0_i32 = arith.constant 0 : i32
    %c0_i32_0 = arith.constant 0 : i32
    %c0_i32_1 = arith.constant 0 : i32
    return %c0_i32, %c0_i32_0 : i32, i32
  }
  func.func @transform_3(%arg0: i32) -> (i32, i32) {
    %c0_i32 = arith.constant 0 : i32
    %c0_i32_0 = arith.constant 0 : i32
    %c0_i32_1 = arith.constant 0 : i32
    return %c0_i32, %c0_i32_0 : i32, i32
  }
  func.func @transform_4(%arg0: i32) -> (i32, i32) {
    %c0_i32 = arith.constant 0 : i32
    %c0_i32_0 = arith.constant 0 : i32
    %c0_i32_1 = arith.constant 0 : i32
    return %c0_i32, %c0_i32_0 : i32, i32
  }
  func.func @transform_5(%arg0: i32) -> (i32, i32) {
    %c0_i32 = arith.constant 0 : i32
    %c0_i32_0 = arith.constant 0 : i32
    %c0_i32_1 = arith.constant 0 : i32
    return %c0_i32, %c0_i32_0 : i32, i32
  }
  func.func @transform_6(%arg0: i32) -> (i32, i32) {
    %c0_i32 = arith.constant 0 : i32
    %c0_i32_0 = arith.constant 0 : i32
    %c0_i32_1 = arith.constant 0 : i32
    return %c0_i32, %c0_i32_0 : i32, i32
  }
  func.func @transform_7(%arg0: i32) -> (i32, i32) {
    %c0_i32 = arith.constant 0 : i32
    %c0_i32_0 = arith.constant 0 : i32
    return %arg0, %c0_i32 : i32, i32
  }
}

</mosaic_0001>

<llo_original>
// kernel: tpu_custom_call.1
$region0: #{tpu_custom_call.1}
  #allocation0 [shape = 'u32[]', space=smem, size = 0x4, offset = 0x4, fixed_abs, tag = 'smem constant byte address 0x4 - core index']
  #allocation1 [shape = 'u32[144,128]{1,0:T(1,128)}', space=vmem, size = 0x12000, scoped, tag = 'internal scratch']
  %s0 = inlined_call_operand.vmem [shape: f32[32,32], index: 0, kind: input, shape index: {}]
  %s1 = inlined_call_operand.vmem [shape: f32[1,32], index: 1, kind: input, shape index: {}]
  %s2 = inlined_call_operand.vmem [shape: f32[1,32], index: 2, kind: input, shape index: {}]
  %s3 = inlined_call_operand.vmem [shape: bf16[96,128], index: 3, kind: input, shape index: {}]
  %s4 = inlined_call_operand.hbm [shape: f32[1,128], index: 4, kind: input, shape index: {}]
  %s5 = inlined_call_operand.vmem [shape: bf16[128,32], index: 5, kind: input, shape index: {}]
  %s6 = inlined_call_operand.vmem [shape: f32[1,32], index: 6, kind: input, shape index: {}]
  %s7 = inlined_call_operand.hbm [shape: f32[32,32], index: 7, kind: output, shape index: {}]
  %s8 = sld [smem:[#allocation0]]
  $region42: #{tpu_custom_call.1} parent=0
    _
  %s10 = ssub.s32 1, %s8
  %s11 = scalar_select 0, %s10, %s8
  $region1: #{tpu_custom_call.1} parent=0
    #allocation2 [shape = 'u8[512]{0}', space=vmem, size = 0x400, scoped, tag = 'input window, operand 4, single buffered']
    #allocation3 [shape = 's32[1]{0}', space=sflag, size = 0x4, scoped, tag = 'scoped memory for tpu_custom_call.1']
    #allocation4 [shape = 's32[1]{0}', space=sflag, size = 0x4, scoped, tag = 'scoped memory for tpu_custom_call.1']
    #allocation5 [shape = 'u8[16384]{0}', space=vmem, size = 0x4000, scoped, tag = 'output window, operand 0, single buffered']
    %12 = vsyncpa [#allocation3], 0
    %13 = vsyncpa [#allocation4], 0
    // Predicated region
    $region2: #{tpu_custom_call.1} parent=1 // pred_check
      _
    $region3: #{tpu_custom_call.1} parent=1 // pred_check_branch
      %15 = sbr.rel (0) target = $region5
    $region4: #{tpu_custom_call.1} parent=1 // pred_region
      _
    $region5: #{tpu_custom_call.1} parent=1 // pred_fallthru
      _
    // Predicated region
    $region6: #{tpu_custom_call.1} parent=1 // pred_check
      _
    $region7: #{tpu_custom_call.1} parent=1 // pred_check_branch
      %17 = sbr.rel (0) target = $region9
    $region8: #{tpu_custom_call.1} parent=1 // pred_region
      _
    $region9: #{tpu_custom_call.1} parent=1 // pred_fallthru
      _
    // Predicated region
    $region10: #{tpu_custom_call.1} parent=1 // pred_check
      _
    $region11: #{tpu_custom_call.1} parent=1 // pred_check_branch
      %19 = sbr.rel (0) target = $region13
    $region12: #{tpu_custom_call.1} parent=1 // pred_region
      _
    $region13: #{tpu_custom_call.1} parent=1 // pred_fallthru
      _
    // Predicated region
    $region14: #{tpu_custom_call.1} parent=1 // pred_check
      _
    $region15: #{tpu_custom_call.1} parent=1 // pred_check_branch
      %21 = sbr.rel (0) target = $region17
    $region16: #{tpu_custom_call.1} parent=1 // pred_region
      _
    $region17: #{tpu_custom_call.1} parent=1 // pred_fallthru
      _
    // Predicated region
    $region18: #{tpu_custom_call.1} parent=1 // pred_check
      _
    $region19: #{tpu_custom_call.1} parent=1 // pred_check_branch
      %23 = sbr.rel (0) target = $region21
    $region20: #{tpu_custom_call.1} parent=1 // pred_region
      %s25 = ssub.s32 16, 16
      %26 = vsyncadd [#allocation3], %s25
      %s28 = sshll.u32 [#allocation2], 4
      %s29 = int_to_ptr.vmem [resolvable:$true] %s28
      %31 = dma.hbm_to_vmem [thread:$0]  %s4, 16, %s29, [#allocation3]
    $region21: #{tpu_custom_call.1} parent=1 // pred_fallthru
      _
    // Predicated region
    $region22: #{tpu_custom_call.1} parent=1 // pred_check
      _
    $region23: #{tpu_custom_call.1} parent=1 // pred_check_branch
      %33 = sbr.rel (0) target = $region25
    $region24: #{tpu_custom_call.1} parent=1 // pred_region
      _
    $region25: #{tpu_custom_call.1} parent=1 // pred_fallthru
      _
    // Predicated region
    $region26: #{tpu_custom_call.1} parent=1 // pred_check
      _
    $region27: #{tpu_custom_call.1} parent=1 // pred_check_branch
      %35 = sbr.rel (0) target = $region29
    $region28: #{tpu_custom_call.1} parent=1 // pred_region
      _
    $region29: #{tpu_custom_call.1} parent=1 // pred_fallthru
      _
    // Predicated region
    $region30: #{tpu_custom_call.1} parent=1 // pred_check
      _
    $region31: #{tpu_custom_call.1} parent=1 // pred_check_branch
      %37 = sbr.rel (0) target = $region33
    $region32: #{tpu_custom_call.1} parent=1 // pred_region
      %38 = dma.done [#allocation3], 16
    $region33: #{tpu_custom_call.1} parent=1 // pred_fallthru
      _
    %v40 = vld [vmem:[%s0] sm:$0xff]
    %v41 = vld [vmem:[%s0 + $0x8] sm:$0xff]
    %v42 = vld [vmem:[%s0 + $0x10] sm:$0xff]
    %v43 = vld [vmem:[%s0 + $0x18] sm:$0xff]
    %vm44 = vcmask 261120
    %v45 = vsel %vm44, %v40, 0.0
    %46 = vadd.xlane.f32.xlu0 %v45
    %v47 = vpop.xlane.xlu0 %46
    %v48 = vsel %vm44, %v41, 0.0
    %49 = vadd.xlane.f32.xlu0 %v48
    %v50 = vpop.xlane.xlu0 %49
    %v51 = vsel %vm44, %v42, 0.0
    %52 = vadd.xlane.f32.xlu0 %v51
    %v53 = vpop.xlane.xlu0 %52
    %v54 = vsel %vm44, %v43, 0.0
    %55 = vadd.xlane.f32.xlu0 %v54
    %v56 = vpop.xlane.xlu0 %55
    %v57 = vrcp.pop 32.0
    %v58 = vmul.f32 %v47, %v57
    %v59 = vmul.f32 %v50, %v57
    %v60 = vmul.f32 %v53, %v57
    %v61 = vmul.f32 %v56, %v57
    %v62 = vsub.f32 %v40, %v58
    %v63 = vsub.f32 %v41, %v59
    %v64 = vsub.f32 %v42, %v60
    %v65 = vsub.f32 %v43, %v61
    %v66 = vmul.f32 %v62, %v62
    %v67 = vmul.f32 %v63, %v63
    %v68 = vmul.f32 %v64, %v64
    %v69 = vmul.f32 %v65, %v65
    %v70 = vsel %vm44, %v66, 0.0
    %71 = vadd.xlane.f32.xlu0 %v70
    %v72 = vpop.xlane.xlu0 %71
    %v73 = vsel %vm44, %v67, 0.0
    %74 = vadd.xlane.f32.xlu0 %v73
    %v75 = vpop.xlane.xlu0 %74
    %v76 = vsel %vm44, %v68, 0.0
    %77 = vadd.xlane.f32.xlu0 %v76
    %v78 = vpop.xlane.xlu0 %77
    %v79 = vsel %vm44, %v69, 0.0
    %80 = vadd.xlane.f32.xlu0 %v79
    %v81 = vpop.xlane.xlu0 %80
    %v82 = vmul.f32 %v72, %v57
    %v83 = vmul.f32 %v75, %v57
    %v84 = vmul.f32 %v78, %v57
    %v85 = vmul.f32 %v81, %v57
    %v86 = vadd.f32 %v82, 1e-05
    %v87 = vadd.f32 %v83, 1e-05
    %v88 = vadd.f32 %v84, 1e-05
    %v89 = vadd.f32 %v85, 1e-05
    %v90 = vrsqrt.pop %v86
    %v91 = vrsqrt.pop %v87
    %v92 = vrsqrt.pop %v88
    %v93 = vrsqrt.pop %v89
    %v94 = vmul.f32 %v62, %v90
    %v95 = vmul.f32 %v63, %v91
    %v96 = vmul.f32 %v64, %v92
    %v97 = vmul.f32 %v65, %v93
    %v98 = vld [vmem:[%s1] sm:$0x1]
    %v100 = vlaneseq
    %v101 = vshrl.u32 %v100, 7
    %v102 = vsub.s32 0, %v101
    %v103 = vrot.slane %v98, %v102
    %v105 = vmul.f32 %v94, %v103
    %v106 = vmul.f32 %v95, %v103
    %v107 = vmul.f32 %v96, %v103
    %v108 = vmul.f32 %v97, %v103
    %v109 = vld [vmem:[%s2] sm:$0x1]
    %v111 = vlaneseq
    %v112 = vshrl.u32 %v111, 7
    %v113 = vsub.s32 0, %v112
    %v114 = vrot.slane %v109, %v113
    %v116 = vadd.f32 %v105, %v114
    %v117 = vadd.f32 %v106, %v114
    %v118 = vadd.f32 %v107, %v114
    %v119 = vadd.f32 %v108, %v114
    %v120 = vlaneseq
    %v121 = vshrl.u32 %v120, 7
    %v122 = vadd.s32 %v121, 8
    %v123 = vadd.s32 %v121, 16
    %v124 = vadd.s32 %v121, 24
    %vm125 = vcmp.lt.s32.totalorder %v121, 0
    %v126 = vsub.s32 0, %v121
    %v127 = vsel %vm125, %v126, %v121
    %v128 = vshrl.u32 %v127, 4
    %v129 = vand.u32 %v127, 15
    %v130 = vsub.s32 0, %v129
    %v131 = vsel %vm125, %v130, %v129
    %vm132 = vcmp.lt.s32.totalorder %v122, 0
    %v133 = vsub.s32 0, %v122
    %v134 = vsel %vm132, %v133, %v122
    %v135 = vshrl.u32 %v134, 4
    %v136 = vand.u32 %v134, 15
    %v137 = vsub.s32 0, %v136
    %v138 = vsel %vm132, %v137, %v136
    %vm139 = vcmp.lt.s32.totalorder %v123, 0
    %v140 = vsub.s32 0, %v123
    %v141 = vsel %vm139, %v140, %v123
    %v142 = vshrl.u32 %v141, 4
    %v143 = vand.u32 %v141, 15
    %v144 = vsub.s32 0, %v143
    %v145 = vsel %vm139, %v144, %v143
    %vm146 = vcmp.lt.s32.totalorder %v124, 0
    %v147 = vsub.s32 0, %v124
    %v148 = vsel %vm146, %v147, %v124
    %v149 = vshrl.u32 %v148, 4
    %v150 = vand.u32 %v148, 15
    %v151 = vsub.s32 0, %v150
    %v152 = vsel %vm146, %v151, %v150
    %vm153 = vcmp.ne.s32.totalorder %v131, 0
    %vm154 = vcmp.ne.s32.totalorder %v138, 0
    %vm155 = vcmp.ne.s32.totalorder %v145, 0
    %vm156 = vcmp.ne.s32.totalorder %v152, 0
    %vm157 = vcmp.lt.s32.totalorder %v131, 0
    %vm158 = vcmp.lt.s32.totalorder %v138, 0
    %vm159 = vcmp.lt.s32.totalorder %v145, 0
    %vm160 = vcmp.lt.s32.totalorder %v152, 0
    %vm161 = vmand %vm157, %vm153
    %vm162 = vmand %vm158, %vm154
    %vm163 = vmand %vm159, %vm155
    %vm164 = vmand %vm160, %vm156
    %v165 = vadd.s32 %v131, 16
    %v166 = vadd.s32 %v138, 16
    %v167 = vadd.s32 %v145, 16
    %v168 = vadd.s32 %v152, 16
    %v169 = vsel %vm161, %v165, %v131
    %v170 = vsel %vm162, %v166, %v138
    %v171 = vsel %vm163, %v167, %v145
    %v172 = vsel %vm164, %v168, %v152
    %v173 = vrot.slane %v116, 7
    %v174 = vrot.slane %v117, 7
    %v175 = vrot.slane %v118, 7
    %v176 = vrot.slane %v119, 7
    %vm177 = vcmp.lt.s32.totalorder %v121, 1
    %v178 = vsel %vm177, %v175, %v176
    %v179 = vsel %vm177, %v174, %v175
    %v180 = vsel %vm177, %v173, %v174
    %v181 = vsel %vm177, %v176, %v173
    %v182 = vadd.s32 %v169, 4294967295
    %v183 = vadd.s32 %v170, 4294967295
    %v184 = vadd.s32 %v171, 4294967295
    %v185 = vadd.s32 %v172, 4294967295
    %vm186 = vcmp.ge.s32.totalorder %v182, 0
    %vm187 = vcmp.ge.s32.totalorder %v183, 0
    %vm188 = vcmp.ge.s32.totalorder %v184, 0
    %vm189 = vcmp.ge.s32.totalorder %v185, 0
    %vm190 = vcmp.lt.s32.totalorder %v182, 16
    %vm191 = vcmp.lt.s32.totalorder %v183, 16
    %vm192 = vcmp.lt.s32.totalorder %v184, 16
    %vm193 = vcmp.lt.s32.totalorder %v185, 16
    %vm194 = vmand %vm186, %vm190
    %vm195 = vmand %vm187, %vm191
    %vm196 = vmand %vm188, %vm192
    %vm197 = vmand %vm189, %vm193
    %v198 = vsel %vm194, 1, 0
    %v199 = vsel %vm195, 1, 0
    %v200 = vsel %vm196, 1, 0
    %v201 = vsel %vm197, 1, 0
    %vm202 = vcmp.eq.s32.totalorder %v198, 1
    %vm203 = vcmp.eq.s32.totalorder %v199, 1
    %vm204 = vcmp.eq.s32.totalorder %v200, 1
    %vm205 = vcmp.eq.s32.totalorder %v201, 1
    %v206 = vsel %vm202, %v181, 0.0
    %v207 = vsel %vm203, %v180, 0.0
    %v208 = vsel %vm204, %v179, 0.0
    %v209 = vsel %vm205, %v178, 0.0
    %v210 = vrot.slane %v116, 1
    %v211 = vrot.slane %v117, 1
    %v212 = vrot.slane %v118, 1
    %v213 = vrot.slane %v119, 1
    %vm214 = vcmp.lt.s32.totalorder %v121, 7
    %v215 = vsel %vm214, %v212, %v213
    %v216 = vsel %vm214, %v211, %v212
    %v217 = vsel %vm214, %v210, %v211
    %v218 = vsel %vm214, %v213, %v210
    %v219 = vadd.s32 %v169, 1
    %v220 = vadd.s32 %v170, 1
    %v221 = vadd.s32 %v171, 1
    %v222 = vadd.s32 %v172, 1
    %vm223 = vcmp.ge.s32.totalorder %v219, 0
    %vm224 = vcmp.ge.s32.totalorder %v220, 0
    %vm225 = vcmp.ge.s32.totalorder %v221, 0
    %vm226 = vcmp.ge.s32.totalorder %v222, 0
    %vm227 = vcmp.lt.s32.totalorder %v219, 16
    %vm228 = vcmp.lt.s32.totalorder %v220, 16
    %vm229 = vcmp.lt.s32.totalorder %v221, 16
    %vm230 = vcmp.lt.s32.totalorder %v222, 16
    %vm231 = vmand %vm223, %vm227
    %vm232 = vmand %vm224, %vm228
    %vm233 = vmand %vm225, %vm229
    %vm234 = vmand %vm226, %vm230
    %v235 = vsel %vm231, 1, 0
    %v236 = vsel %vm232, 1, 0
    %v237 = vsel %vm233, 1, 0
    %v238 = vsel %vm234, 1, 0
    %vm239 = vcmp.eq.s32.totalorder %v235, 1
    %vm240 = vcmp.eq.s32.totalorder %v236, 1
    %vm241 = vcmp.eq.s32.totalorder %v237, 1
    %vm242 = vcmp.eq.s32.totalorder %v238, 1
    %v243 = vsel %vm239, %v217, 0.0
    %v244 = vsel %vm240, %v216, 0.0
    %v245 = vsel %vm241, %v215, 0.0
    %v246 = vsel %vm242, %v218, 0.0
    %251 = vrot.lane.b32.xlu0 %v116, 32
    %v252 = vpop.permute.xlu0 %251
    %253 = vrot.lane.b32.xlu0 %v117, 32
    %v254 = vpop.permute.xlu0 %253
    %255 = vrot.lane.b32.xlu0 %v118, 32
    %v256 = vpop.permute.xlu0 %255
    %257 = vrot.lane.b32.xlu0 %v119, 32
    %v258 = vpop.permute.xlu0 %257
    %267 = vrot.lane.b32.xlu0 %v243, 64
    %v268 = vpop.permute.xlu0 %267
    %269 = vrot.lane.b32.xlu0 %v244, 64
    %v270 = vpop.permute.xlu0 %269
    %271 = vrot.lane.b32.xlu0 %v245, 64
    %v272 = vpop.permute.xlu0 %271
    %273 = vrot.lane.b32.xlu0 %v246, 64
    %v274 = vpop.permute.xlu0 %273
    %v279 = vsel %vm44, %v206, %v252
    %v280 = vsel %vm44, %v207, %v254
    %v281 = vsel %vm44, %v208, %v256
    %v282 = vsel %vm44, %v209, %v258
    %vm283 = vcmask 523264
    %v284 = vsel %vm283, %v279, %v268
    %v285 = vsel %vm283, %v280, %v270
    %v286 = vsel %vm283, %v281, %v272
    %v287 = vsel %vm283, %v282, %v274
    %v288 = vpack.c.bf16 %v285, %v284
    %v289 = vpack.c.bf16 %v287, %v286
    %v290 = vld [vmem:[%s3] sm:$0xf]
    %v291 = vld [vmem:[%s3 + $0x4] sm:$0xf]
    %v292 = vld [vmem:[%s3 + $0x8] sm:$0xf]
    %v293 = vld [vmem:[%s3 + $0xc] sm:$0xf]
    %v294 = vld [vmem:[%s3 + $0x10] sm:$0xf]
    %v295 = vld [vmem:[%s3 + $0x14] sm:$0xf]
    %v296 = vld [vmem:[%s3 + $0x18] sm:$0xf]
    %v297 = vld [vmem:[%s3 + $0x1c] sm:$0xf]
    %v298 = vld [vmem:[%s3 + $0x20] sm:$0xf]
    %v299 = vld [vmem:[%s3 + $0x24] sm:$0xf]
    %v300 = vld [vmem:[%s3 + $0x28] sm:$0xf]
    %v301 = vld [vmem:[%s3 + $0x2c] sm:$0xf]
    %v302 = vld [vmem:[#allocation2] sm:$0x1]
    %v304 = vlaneseq
    %v305 = vshrl.u32 %v304, 7
    %v306 = vsub.s32 0, %v305
    %v307 = vrot.slane %v302, %v306
    %v321 = vunpack.c.l.b16 %v290
    %v322 = vunpack.c.l.b16 %v291
    %v323 = vunpack.c.l.b16 %v292
    %v324 = vunpack.c.l.b16 %v293
    %v325 = vunpack.c.l.b16 %v294
    %v326 = vunpack.c.l.b16 %v295
    %v327 = vunpack.c.l.b16 %v296
    %v328 = vunpack.c.l.b16 %v297
    %v329 = vunpack.c.l.b16 %v298
    %v330 = vunpack.c.l.b16 %v299
    %v331 = vunpack.c.l.b16 %v300
    %v332 = vunpack.c.l.b16 %v301
    %v333 = vpack.c.b16 %v322, %v321
    %v334 = vpack.c.b16 %v324, %v323
    %v335 = vpack.c.b16 %v326, %v325
    %v336 = vpack.c.b16 %v328, %v327
    %v337 = vpack.c.b16 %v330, %v329
    %v338 = vpack.c.b16 %v332, %v331
    %vm345 = vcmask 785408
    %v347 = vsel %vm345, %v288, 0
    %v350 = vsel %vm345, %v289, 0
    %352 = vmatprep.subr.bf16.mxu0 0
    %353 = vmatpush1.bf16.msra.mxu0 %v333
    %354 = vmatprep.subr.bf16.mxu0 0
    %355 = vmatpush1.bf16.msra.mxu0 %v334
    %356 = vmatprep.subr.bf16.mxu0 0
    %357 = vmatpush1.bf16.msra.mxu0 %v335
    %358 = vmatprep.subr.bf16.mxu0 0
    %359 = vmatpush1.bf16.msra.mxu0 %v336
    %360 = vmatprep.subr.bf16.mxu0 0
    %361 = vmatpush1.bf16.msra.mxu0 %v337
    %362 = vmatprep.subr.bf16.mxu0 0
    %363 = vmatpush1.bf16.msra.mxu0 %v338
    %364 = vmatprep.subr.bf16.mxu0 0
    %365 = vmatpush1.bf16.msra.mxu0 0
    %366 = vmatprep.subr.bf16.mxu0 0
    %367 = vmatpush1.bf16.msra.mxu0 0
    %368 = vmatprep.subr.bf16.mxu0 0
    %369 = vmatpush1.bf16.msra.mxu0 0
    %370 = vmatprep.subr.bf16.mxu0 0
    %371 = vmatpush1.bf16.msra.mxu0 0
    %372 = vmatprep.subr.bf16.mxu0 0
    %373 = vmatpush1.bf16.msra.mxu0 0
    %374 = vmatprep.subr.bf16.mxu0 0
    %375 = vmatpush1.bf16.msra.mxu0 0
    %376 = vmatprep.subr.bf16.mxu0 0
    %377 = vmatpush1.bf16.msra.mxu0 0
    %378 = vmatprep.subr.bf16.mxu0 0
    %379 = vmatpush1.bf16.msra.mxu0 0
    %380 = vmatprep.subr.bf16.mxu0 0
    %381 = vmatpush1.bf16.msra.mxu0 0
    %382 = vmatprep.subr.bf16.mxu0 0
    %383 = vmatpush1.bf16.msra.mxu0 0
    %384 = vmatprep.mubr.bf16.mxu0 0
    %385 = vmatmul.mubr.bf16.gmra.mrb[0].mxu0 %v347
    %v386 = vpop.f32.mrb[0].mxu0
    %v387 = vadd.f32 %v307, %v386
    %v388 = vpop.f32.mrb[0].mxu0
    %v389 = vpop.f32.mrb[0].mxu0
    %v390 = vadd.f32 %v307, %v389
    %v391 = vpop.f32.mrb[0].mxu0
    %392 = vmatprep.mubr.bf16.mxu0 0
    %393 = vmatmul.mubr.bf16.gmra.mrb[0].mxu0 %v350
    %v394 = vpop.f32.mrb[0].mxu0
    %v395 = vadd.f32 %v307, %v394
    %v396 = vpop.f32.mrb[0].mxu0
    %v397 = vpop.f32.mrb[0].mxu0
    %v398 = vadd.f32 %v307, %v397
    %v399 = vpop.f32.mrb[0].mxu0
    %400 = vdwg.mxu0
    %v401 = vmul.f32 %v387, 0.3
    %v402 = vmul.f32 %v390, 0.3
    %v403 = vmul.f32 %v395, 0.3
    %v404 = vmul.f32 %v398, 0.3
    %v405 = vmax.f32 %v387, %v401
    %v406 = vmax.f32 %v390, %v402
    %v407 = vmax.f32 %v395, %v403
    %v408 = vmax.f32 %v398, %v404
    %v409 = vpack.c.bf16 %v406, %v405
    %v410 = vpack.c.bf16 %v408, %v407
    %v411 = vld [vmem:[%s5] sm:$0xf]
    %v412 = vld [vmem:[%s5 + $0x4] sm:$0xf]
    %v413 = vld [vmem:[%s5 + $0x8] sm:$0xf]
    %v414 = vld [vmem:[%s5 + $0xc] sm:$0xf]
    %v415 = vld [vmem:[%s5 + $0x10] sm:$0xf]
    %v416 = vld [vmem:[%s5 + $0x14] sm:$0xf]
    %v417 = vld [vmem:[%s5 + $0x18] sm:$0xf]
    %v418 = vld [vmem:[%s5 + $0x1c] sm:$0xf]
    %v419 = vld [vmem:[%s5 + $0x20] sm:$0xf]
    %v420 = vld [vmem:[%s5 + $0x24] sm:$0xf]
    %v421 = vld [vmem:[%s5 + $0x28] sm:$0xf]
    %v422 = vld [vmem:[%s5 + $0x2c] sm:$0xf]
    %v423 = vld [vmem:[%s5 + $0x30] sm:$0xf]
    %v424 = vld [vmem:[%s5 + $0x34] sm:$0xf]
    %v425 = vld [vmem:[%s5 + $0x38] sm:$0xf]
    %v426 = vld [vmem:[%s5 + $0x3c] sm:$0xf]
    %v427 = vld [vmem:[%s6] sm:$0x1]
    %v429 = vlaneseq
    %v430 = vshrl.u32 %v429, 7
    %v431 = vsub.s32 0, %v430
    %v432 = vrot.slane %v427, %v431
    %v450 = vunpack.c.l.b16 %v411
    %v451 = vunpack.c.l.b16 %v412
    %v452 = vunpack.c.l.b16 %v413
    %v453 = vunpack.c.l.b16 %v414
    %v454 = vunpack.c.l.b16 %v415
    %v455 = vunpack.c.l.b16 %v416
    %v456 = vunpack.c.l.b16 %v417
    %v457 = vunpack.c.l.b16 %v418
    %v458 = vunpack.c.l.b16 %v419
    %v459 = vunpack.c.l.b16 %v420
    %v460 = vunpack.c.l.b16 %v421
    %v461 = vunpack.c.l.b16 %v422
    %v462 = vunpack.c.l.b16 %v423
    %v463 = vunpack.c.l.b16 %v424
    %v464 = vunpack.c.l.b16 %v425
    %v465 = vunpack.c.l.b16 %v426
    %v466 = vpack.c.b16 %v451, %v450
    %v467 = vpack.c.b16 %v453, %v452
    %v468 = vpack.c.b16 %v455, %v454
    %v469 = vpack.c.b16 %v457, %v456
    %v470 = vpack.c.b16 %v459, %v458
    %v471 = vpack.c.b16 %v461, %v460
    %v472 = vpack.c.b16 %v463, %v462
    %v473 = vpack.c.b16 %v465, %v464
    %482 = vmatprep.subr.bf16.mxu0 0
    %483 = vmatpush1.bf16.msra.mxu0 %v466
    %484 = vmatprep.subr.bf16.mxu0 0
    %485 = vmatpush1.bf16.msra.mxu0 %v467
    %486 = vmatprep.subr.bf16.mxu0 0
    %487 = vmatpush1.bf16.msra.mxu0 %v468
    %488 = vmatprep.subr.bf16.mxu0 0
    %489 = vmatpush1.bf16.msra.mxu0 %v469
    %490 = vmatprep.subr.bf16.mxu0 0
    %491 = vmatpush1.bf16.msra.mxu0 %v470
    %492 = vmatprep.subr.bf16.mxu0 0
    %493 = vmatpush1.bf16.msra.mxu0 %v471
    %494 = vmatprep.subr.bf16.mxu0 0
    %495 = vmatpush1.bf16.msra.mxu0 %v472
    %496 = vmatprep.subr.bf16.mxu0 0
    %497 = vmatpush1.bf16.msra.mxu0 %v473
    %498 = vmatprep.subr.bf16.mxu0 0
    %499 = vmatpush1.bf16.msra.mxu0 0
    %500 = vmatprep.subr.bf16.mxu0 0
    %501 = vmatpush1.bf16.msra.mxu0 0
    %502 = vmatprep.subr.bf16.mxu0 0
    %503 = vmatpush1.bf16.msra.mxu0 0
    %504 = vmatprep.subr.bf16.mxu0 0
    %505 = vmatpush1.bf16.msra.mxu0 0
    %506 = vmatprep.subr.bf16.mxu0 0
    %507 = vmatpush1.bf16.msra.mxu0 0
    %508 = vmatprep.subr.bf16.mxu0 0
    %509 = vmatpush1.bf16.msra.mxu0 0
    %510 = vmatprep.subr.bf16.mxu0 0
    %511 = vmatpush1.bf16.msra.mxu0 0
    %512 = vmatprep.subr.bf16.mxu0 0
    %513 = vmatpush1.bf16.msra.mxu0 0
    %514 = vmatprep.mubr.bf16.mxu0 0
    %515 = vmatmul.mubr.bf16.gmra.mrb[0].mxu0 %v409
    %v516 = vpop.f32.mrb[0].mxu0
    %v517 = vadd.f32 %v432, %v516
    %v518 = vpop.f32.mrb[0].mxu0
    %v519 = vpop.f32.mrb[0].mxu0
    %v520 = vadd.f32 %v432, %v519
    %v521 = vpop.f32.mrb[0].mxu0
    %522 = vmatprep.mubr.bf16.mxu0 0
    %523 = vmatmul.mubr.bf16.gmra.mrb[0].mxu0 %v410
    %v524 = vpop.f32.mrb[0].mxu0
    %v525 = vadd.f32 %v432, %v524
    %v526 = vpop.f32.mrb[0].mxu0
    %v527 = vpop.f32.mrb[0].mxu0
    %v528 = vadd.f32 %v432, %v527
    %v529 = vpop.f32.mrb[0].mxu0
    %530 = vdwg.mxu0
    %v531 = vmul.f32 %v517, 0.5
    %v532 = vmul.f32 %v520, 0.5
    %v533 = vmul.f32 %v525, 0.5
    %v534 = vmul.f32 %v528, 0.5
    %535 = vst.msk [vmem:[#allocation5] sm:$0xff] %vm44, %v531
    %536 = vst.msk [vmem:[#allocation5 + $0x8] sm:$0xff] %vm44, %v532
    %537 = vst.msk [vmem:[#allocation5 + $0x10] sm:$0xff] %vm44, %v533
    %538 = vst.msk [vmem:[#allocation5 + $0x18] sm:$0xff] %vm44, %v534
    // Predicated region
    $region34: #{tpu_custom_call.1} parent=1 // pred_check
      _
    $region35: #{tpu_custom_call.1} parent=1 // pred_check_branch
      %540 = sbr.rel (0) target = $region37
    $region36: #{tpu_custom_call.1} parent=1 // pred_region
      %s542 = ssub.s32 512, 512
      %543 = vsyncadd [#allocation4], %s542
      %s544 = sshll.u32 [#allocation5], 4
      %s545 = int_to_ptr.vmem [resolvable:$true] %s544
      %550 = dma.vmem_to_hbm [thread:$0]  %s545, 512, %s7, [#allocation4], 128, 128, 8
    $region37: #{tpu_custom_call.1} parent=1 // pred_fallthru
      _
    // Predicated region
    $region38: #{tpu_custom_call.1} parent=1 // pred_check
      _
    $region39: #{tpu_custom_call.1} parent=1 // pred_check_branch
      %552 = sbr.rel (0) target = $region41
    $region40: #{tpu_custom_call.1} parent=1 // pred_region
      %553 = dma.done [#allocation4], 512
    $region41: #{tpu_custom_call.1} parent=1 // pred_fallthru
      _
    %554 = vsyncpa [#allocation3], 1
    %555 = vsyncpa [#allocation4], 1

</llo_original>
